<compile_context>
chip_gen: v7x
topology: tpu7x:2x2x1
jax: 0.10.0
libtpu: 0.0.40
codegen_flags: <defaults>
</compile_context>

<pallas_src>
import jax
import jax.numpy as jnp
from jax.experimental import pallas as pl
from jax.experimental.pallas import tpu as pltpu


def _mul_kernel(*refs):
    """Elementwise product of the first N refs, written to the last ref."""
    out_ref = refs[-1]
    acc = refs[0][...]
    for r in refs[1:-1]:
        acc = acc * r[...]
    out_ref[...] = acc


def _choose_2d_layout(total: int):
    """Pick a lane-dense (rows, lanes) layout.

    Prefers lanes as a wide multiple of 128 with rows a multiple of 8 so every
    vreg is fully occupied and stores are unmasked. Returns (rows, lanes, pad)
    where `pad` is the number of flat elements to append (0 on the hot path).
    """
    for lanes in (2048, 1024, 512, 256, 128):
        if total % lanes == 0 and (total // lanes) % 8 == 0:
            return total // lanes, lanes, 0
    if total % 128 == 0:
        return total // 128, 128, 0
    # General fallback for odd totals: pad flat vector to a multiple of 8*128.
    padded = ((total + 1023) // 1024) * 1024
    return padded // 128, 128, padded - total


def multiply_operation_node_forward(*child_values: jax.Array,
                                    tile_rows: int = 1024) -> jax.Array:
    """Pallas implementation of MultiplyOperationNode.forward.

    `child_values` are the children's outputs on the batch (all same shape /
    dtype); the result is their elementwise product.
    """
    assert len(child_values) >= 2, "Mul node requires at least 2 children"
    shape = child_values[0].shape
    dtype = child_values[0].dtype
    for cv in child_values[1:]:
        assert cv.shape == shape and cv.dtype == dtype

    total = 1
    for d in shape:
        total *= d

    rows, lanes, pad = _choose_2d_layout(total)

    def to_slab(x):
        flat = x.reshape(total)
        if pad:
            flat = jnp.pad(flat, (0, pad))  # padded tail is sliced off below
        return flat.reshape(rows, lanes)

    slabs = [to_slab(x) for x in child_values]
    n = len(slabs)

    bytes_per = rows * lanes * dtype.itemsize
    # Single un-gridded block whenever all operands + output fit comfortably
    # in VMEM (well under v7x's 64 MiB / 32 MiB scoped default).
    single_block = (n + 1) * bytes_per <= 16 * 1024 * 1024

    if single_block:
        out2d = pl.pallas_call(
            _mul_kernel,
            out_shape=jax.ShapeDtypeStruct((rows, lanes), dtype),
            in_specs=[pl.BlockSpec(memory_space=pltpu.MemorySpace.VMEM)] * n,
            out_specs=pl.BlockSpec(memory_space=pltpu.MemorySpace.VMEM),
        )(*slabs)
    else:
        # Large-input path: big tiles (amortize ~0.35 us/step grid overhead).
        tr = max(8, (min(tile_rows, rows) // 8) * 8)
        spec = pl.BlockSpec((tr, lanes), lambda i: (i, 0))
        out2d = pl.pallas_call(
            _mul_kernel,
            out_shape=jax.ShapeDtypeStruct((rows, lanes), dtype),
            grid_spec=pltpu.PrefetchScalarGridSpec(
                num_scalar_prefetch=0,
                grid=(pl.cdiv(rows, tr),),
                in_specs=[spec] * n,
                out_specs=spec,
            ),
            compiler_params=pltpu.CompilerParams(
                dimension_semantics=("parallel",)),
        )(*slabs)

    out_flat = out2d.reshape(rows * lanes)
    if pad:
        out_flat = out_flat[:total]
    return out_flat.reshape(shape)


# TODO(synk): tree-building/bookkeeping methods (add_child, finalize_children,
# sympy_str, count_learnable_params) are host-side Python with no kernel
# equivalent; only forward() is implemented here.


if __name__ == "__main__":
    key = jax.random.PRNGKey(0)
    k1, k2, k3 = jax.random.split(key, 3)

    # NCHW batch shape: batch=2, channels=4, spatial=16x16.
    batch_shape = (2, 4, 16, 16)
    # Simulate three child nodes' values evaluated on the batch.
    c1 = jax.random.normal(k1, batch_shape, dtype=jnp.float32)
    c2 = jax.random.normal(k2, batch_shape, dtype=jnp.float32)
    c3 = jax.random.normal(k3, batch_shape, dtype=jnp.float32)

    out = multiply_operation_node_forward(c1, c2, c3)
    out = jax.block_until_ready(out)

    # Reference: math.prod over children == elementwise c1 * c2 * c3.
    ref = c1 * c2 * c3
    assert out.shape == batch_shape and out.dtype == jnp.float32
    assert jnp.max(jnp.abs(out - ref)) < 1e-5

    print("KERNEL_OK")
</pallas_src>

<mosaic_0001>
module attributes {stable_mosaic.version = 11 : i64} {
  func.func @_mul_kernel(%arg0: memref<8x256xf32, #tpu.memory_space<vmem>>, %arg1: memref<8x256xf32, #tpu.memory_space<vmem>>, %arg2: memref<8x256xf32, #tpu.memory_space<vmem>>, %arg3: memref<8x256xf32, #tpu.memory_space<vmem>>) attributes {dimension_semantics = [], scalar_prefetch = 0 : i64, scratch_operands = 0 : i64, tpu.core_type = #tpu.core_type<tc>} {
    %c0 = arith.constant 0 : index
    %c0_0 = arith.constant 0 : index
    %0 = vector.load %arg0[%c0, %c0_0] : memref<8x256xf32, #tpu.memory_space<vmem>>, vector<8x256xf32>
    %c0_1 = arith.constant 0 : index
    %c0_2 = arith.constant 0 : index
    %1 = vector.load %arg1[%c0_1, %c0_2] : memref<8x256xf32, #tpu.memory_space<vmem>>, vector<8x256xf32>
    %2 = arith.mulf %0, %1 : vector<8x256xf32>
    %c0_3 = arith.constant 0 : index
    %c0_4 = arith.constant 0 : index
    %3 = vector.load %arg2[%c0_3, %c0_4] : memref<8x256xf32, #tpu.memory_space<vmem>>, vector<8x256xf32>
    %4 = arith.mulf %2, %3 : vector<8x256xf32>
    %c0_5 = arith.constant 0 : index
    %c0_6 = arith.constant 0 : index
    %5 = vector.load %arg3[%c0_5, %c0_6] : memref<8x256xf32, #tpu.memory_space<vmem>>, vector<8x256xf32>
    tpu.vector_store %arg3[%c0_5, %c0_6], %4 {strides = array<i32>} : memref<8x256xf32, #tpu.memory_space<vmem>>, vector<8x256xf32>,
    return
  }
}

</mosaic_0001>

<llo_original>
// kernel: tpu_custom_call.1
$region0: #{tpu_custom_call.1}
  #allocation0 [shape = 'u32[]', space=smem, size = 0x4, offset = 0x4, fixed_abs, tag = 'smem constant byte address 0x4 - core index']
  #allocation1 [shape = 'u32[144,128]{1,0:T(1,128)}', space=vmem, size = 0x12000, scoped, tag = 'internal scratch']
  %s0 = inlined_call_operand.hbm [shape: f32[8,256], index: 0, kind: input, shape index: {}]
  %s1 = inlined_call_operand.hbm [shape: f32[8,256], index: 1, kind: input, shape index: {}]
  %s2 = inlined_call_operand.hbm [shape: f32[8,256], index: 2, kind: input, shape index: {}]
  %s3 = inlined_call_operand.hbm [shape: f32[8,256], index: 3, kind: output, shape index: {}]
  %s4 = sld [smem:[#allocation0]]
  $region34: #{tpu_custom_call.1} parent=0
    _
  %s6 = ssub.s32 1, %s4
  %s7 = scalar_select 0, %s6, %s4
  $region1: #{tpu_custom_call.1} parent=0
    #allocation2 [shape = 'u8[8192]{0}', space=vmem, size = 0x2000, scoped, tag = 'input window, operand 0, single buffered']
    #allocation3 [shape = 's32[1]{0}', space=sflag, size = 0x4, scoped, tag = 'scoped memory for tpu_custom_call.1']
    #allocation4 [shape = 's32[1]{0}', space=sflag, size = 0x4, scoped, tag = 'scoped memory for tpu_custom_call.1']
    #allocation5 [shape = 'u8[8192]{0}', space=vmem, size = 0x2000, scoped, tag = 'input window, operand 1, single buffered']
    #allocation6 [shape = 's32[1]{0}', space=sflag, size = 0x4, scoped, tag = 'scoped memory for tpu_custom_call.1']
    #allocation7 [shape = 'u8[8192]{0}', space=vmem, size = 0x2000, scoped, tag = 'input window, operand 2, single buffered']
    #allocation8 [shape = 'u8[8192]{0}', space=vmem, size = 0x2000, scoped, tag = 'output window, operand 0, single buffered']
    %8 = vsyncpa [#allocation3], 0
    %9 = vsyncpa [#allocation6], 0
    %10 = vsyncpa [#allocation4], 0
    // Predicated region
    $region2: #{tpu_custom_call.1} parent=1 // pred_check
      _
    $region3: #{tpu_custom_call.1} parent=1 // pred_check_branch
      %12 = sbr.rel (0) target = $region5
    $region4: #{tpu_custom_call.1} parent=1 // pred_region
      %s14 = ssub.s32 256, 256
      %15 = vsyncadd [#allocation3], %s14
      %s17 = sshll.u32 [#allocation2], 4
      %s18 = int_to_ptr.vmem [resolvable:$true] %s17
      %20 = dma.hbm_to_vmem [thread:$0]  %s0, 256, %s18, [#allocation3]
    $region5: #{tpu_custom_call.1} parent=1 // pred_fallthru
      _
    // Predicated region
    $region6: #{tpu_custom_call.1} parent=1 // pred_check
      _
    $region7: #{tpu_custom_call.1} parent=1 // pred_check_branch
      %22 = sbr.rel (0) target = $region9
    $region8: #{tpu_custom_call.1} parent=1 // pred_region
      %s24 = ssub.s32 256, 256
      %25 = vsyncadd [#allocation6], %s24
      %s27 = sshll.u32 [#allocation5], 4
      %s28 = int_to_ptr.vmem [resolvable:$true] %s27
      %30 = dma.hbm_to_vmem [thread:$0]  %s1, 256, %s28, [#allocation6]
    $region9: #{tpu_custom_call.1} parent=1 // pred_fallthru
      _
    // Predicated region
    $region10: #{tpu_custom_call.1} parent=1 // pred_check
      _
    $region11: #{tpu_custom_call.1} parent=1 // pred_check_branch
      %32 = sbr.rel (0) target = $region13
    $region12: #{tpu_custom_call.1} parent=1 // pred_region
      %s34 = ssub.s32 256, 256
      %35 = vsyncadd [#allocation6], %s34
      %s37 = sshll.u32 [#allocation7], 4
      %s38 = int_to_ptr.vmem [resolvable:$true] %s37
      %40 = dma.hbm_to_vmem [thread:$0]  %s2, 256, %s38, [#allocation6]
    $region13: #{tpu_custom_call.1} parent=1 // pred_fallthru
      _
    // Predicated region
    $region14: #{tpu_custom_call.1} parent=1 // pred_check
      _
    $region15: #{tpu_custom_call.1} parent=1 // pred_check_branch
      %42 = sbr.rel (0) target = $region17
    $region16: #{tpu_custom_call.1} parent=1 // pred_region
      %43 = dma.done [#allocation3], 256
    $region17: #{tpu_custom_call.1} parent=1 // pred_fallthru
      _
    // Predicated region
    $region18: #{tpu_custom_call.1} parent=1 // pred_check
      _
    $region19: #{tpu_custom_call.1} parent=1 // pred_check_branch
      %45 = sbr.rel (0) target = $region21
    $region20: #{tpu_custom_call.1} parent=1 // pred_region
      %46 = dma.done [#allocation6], 256
    $region21: #{tpu_custom_call.1} parent=1 // pred_fallthru
      _
    // Predicated region
    $region22: #{tpu_custom_call.1} parent=1 // pred_check
      _
    $region23: #{tpu_custom_call.1} parent=1 // pred_check_branch
      %48 = sbr.rel (0) target = $region25
    $region24: #{tpu_custom_call.1} parent=1 // pred_region
      %49 = dma.done [#allocation6], 256
    $region25: #{tpu_custom_call.1} parent=1 // pred_fallthru
      _
    %v50 = vld [vmem:[#allocation2] sm:$0xff]
    %v51 = vld [vmem:[#allocation2 + $0x8] sm:$0xff]
    %v52 = vld [vmem:[#allocation5] sm:$0xff]
    %v53 = vld [vmem:[#allocation5 + $0x8] sm:$0xff]
    %v54 = vmul.f32 %v50, %v52
    %v55 = vmul.f32 %v51, %v53
    %v56 = vld [vmem:[#allocation7] sm:$0xff]
    %v57 = vld [vmem:[#allocation7 + $0x8] sm:$0xff]
    %v58 = vmul.f32 %v54, %v56
    %v59 = vmul.f32 %v55, %v57
    %60 = vst [vmem:[#allocation8] sm:$0xff] %v58
    %61 = vst [vmem:[#allocation8 + $0x8] sm:$0xff] %v59
    // Predicated region
    $region26: #{tpu_custom_call.1} parent=1 // pred_check
      _
    $region27: #{tpu_custom_call.1} parent=1 // pred_check_branch
      %63 = sbr.rel (0) target = $region29
    $region28: #{tpu_custom_call.1} parent=1 // pred_region
      %s65 = ssub.s32 256, 256
      %66 = vsyncadd [#allocation4], %s65
      %s68 = sshll.u32 [#allocation8], 4
      %s69 = int_to_ptr.vmem [resolvable:$true] %s68
      %71 = dma.vmem_to_hbm [thread:$0]  %s69, 256, %s3, [#allocation4]
    $region29: #{tpu_custom_call.1} parent=1 // pred_fallthru
      _
    // Predicated region
    $region30: #{tpu_custom_call.1} parent=1 // pred_check
      _
    $region31: #{tpu_custom_call.1} parent=1 // pred_check_branch
      %73 = sbr.rel (0) target = $region33
    $region32: #{tpu_custom_call.1} parent=1 // pred_region
      %74 = dma.done [#allocation4], 256
    $region33: #{tpu_custom_call.1} parent=1 // pred_fallthru
      _
    %75 = vsyncpa [#allocation3], 1
    %76 = vsyncpa [#allocation6], 1
    %77 = vsyncpa [#allocation4], 1

</llo_original>
